<compile_context>
chip_gen: v7x
topology: tpu7x:2x2x1
jax: 0.10.0
libtpu: 0.0.40
codegen_flags: <defaults>
</compile_context>

<pallas_src>
import functools

import jax
import jax.numpy as jnp
from jax import lax
from jax.experimental import pallas as pl
from jax.experimental.pallas import tpu as pltpu


def _round_up(v, m):
    return (v + m - 1) // m * m


def _mlp_sparsemax_kernel(x_ref, w_ref, b_ref, att_ref, o_ref, *, num_models, num_classes):
    """One batch tile, batch-in-lanes: fused heads matmul, sparsemax over models, combine."""
    M, C = num_models, num_classes

    # Single fused MXU dot, transposed ("NT") orientation: [MC_pad, TN], f32 accumulation.
    outs = lax.dot_general(
        w_ref[...], x_ref[...],
        dimension_numbers=(((1,), (1,)), ((), ())),
        preferred_element_type=jnp.float32,
    )
    outs = outs + b_ref[...]                              # [MC_pad, 1] bias, bcast over lanes

    # Per-model class blocks [C, TN] and attention logits z_m = cls_m @ att as lane-dense
    # [1, TN] rows (the C-term att contraction runs in f32 on the VPU, att scalars in SMEM).
    blocks = []
    zr = []
    for m in range(M):
        blk = outs[m * C:(m + 1) * C, :]
        z = blk[0:1, :] * att_ref[0]
        for c in range(1, C):
            z = z + blk[c:c + 1, :] * att_ref[c]
        blocks.append(blk)
        zr.append(z)

    # ---- sparsemax over the model axis (dim=1 of the original [N, M] logits) ----------
    zmax = zr[0]
    for m in range(1, M):
        zmax = jnp.maximum(zmax, zr[m])
    zr = [z - zmax for z in zr]                           # matches in-place `input -= max`

    # descending sort via a static compare-exchange network (M is small & static)
    srt = list(zr)
    for i in range(M):
        for j in range(M - 1 - i):
            a, b = srt[j], srt[j + 1]
            srt[j], srt[j + 1] = jnp.maximum(a, b), jnp.minimum(a, b)

    # cumulative sums of sorted values, minus 1 (as in _threshold_and_support)
    cums = []
    acc = srt[0]
    cums.append(acc - 1.0)
    for k in range(1, M):
        acc = acc + srt[k]
        cums.append(acc - 1.0)

    # support size = #{k : (k+1) * z_sorted[k] > cumsum[k]}   (always >= 1)
    supp = (srt[0] > cums[0]).astype(jnp.float32)
    for k in range(1, M):
        supp = supp + ((k + 1.0) * srt[k] > cums[k]).astype(jnp.float32)

    # tau = cumsum[supp - 1] / supp   (gather replaced by selects; supp is an exact f32 int)
    tau = cums[0]
    for k in range(1, M):
        tau = jnp.where(supp == (k + 1.0), cums[k], tau)
    tau = tau / supp

    # weighted sum of per-model class outputs: sum_m max(z_m - tau, 0) * cls_m  -> [C, TN]
    res = jnp.maximum(zr[0] - tau, 0.0) * blocks[0]
    for m in range(1, M):
        res = res + jnp.maximum(zr[m] - tau, 0.0) * blocks[m]
    o_ref[...] = res.astype(o_ref.dtype)


def mlp_module_forward(x, w, b, att, *, tile_n=16384, matmul_dtype=None):
    """x: [N, D], w: [M, D, C], b: [M, C], att: [C, 1]  ->  [N, C]."""
    N, D = x.shape
    M, _, C = w.shape
    MC = M * C
    out_dtype = x.dtype

    # ---- wrapper-side packing: stacked heads transposed to [MC_pad, D] (row m*C+c = w[m,:,c])
    w32 = w.astype(jnp.float32)
    b32 = b.astype(jnp.float32)
    att32 = att.astype(jnp.float32).reshape(C)

    mc_pad = _round_up(MC, 8)                             # sublane-group aligned
    w_cls = jnp.zeros((mc_pad, D), jnp.float32).at[:MC].set(
        jnp.transpose(w32, (0, 2, 1)).reshape(MC, D))
    b_cls = jnp.zeros((mc_pad, 1), jnp.float32).at[:MC].set(b32.reshape(MC, 1))

    x_mm = x
    if matmul_dtype is not None:
        # NOTE: ideally x already arrives in matmul_dtype (a wrapper-side cast is an extra
        # HBM round trip); the cast below only happens when it is actually needed.
        if x.dtype != matmul_dtype:
            x_mm = x.astype(matmul_dtype)
        w_cls = w_cls.astype(matmul_dtype)

    # Batch tile = lane dim of the [C, TN] output, so it must be a multiple of 128 (or the
    # full batch).  ~2 MiB of x per step amortises the ~0.35 us per-step pipeline cost.
    if int(tile_n) >= N:
        tile = N
    else:
        tile = max(128, (int(tile_n) // 128) * 128)
        if tile >= N:
            tile = N
    grid = (pl.cdiv(N, tile),)                            # ragged tail handled by Pallas masking

    kernel = functools.partial(_mlp_sparsemax_kernel, num_models=M, num_classes=C)
    out_t = pl.pallas_call(
        kernel,
        out_shape=jax.ShapeDtypeStruct((C, N), out_dtype),
        grid_spec=pltpu.PrefetchScalarGridSpec(
            num_scalar_prefetch=0,
            grid=grid,
            in_specs=[
                pl.BlockSpec((tile, D), lambda i: (i, 0)),    # streamed x tile
                pl.BlockSpec((mc_pad, D), lambda i: (0, 0)),  # invariant: DMA'd once
                pl.BlockSpec((mc_pad, 1), lambda i: (0, 0)),  # invariant: DMA'd once
                pl.BlockSpec(memory_space=pltpu.MemorySpace.SMEM),  # att scalars
            ],
            out_specs=pl.BlockSpec((C, tile), lambda i: (0, i)),
        ),
        compiler_params=pltpu.CompilerParams(
            dimension_semantics=("parallel",),
            vmem_limit_bytes=48 * 1024 * 1024,            # big-tile headroom (v5e default: 16 MiB)
        ),
    )(x_mm, w_cls, b_cls, att32)

    return out_t.T                                        # [C, N] -> [N, C] (layout plumbing)


def reference_forward(x, w, b, att):
    """Pure-JAX mirror of MLPModule.forward for validation (no MXU rewrites on the att path)."""
    M = w.shape[0]
    outs = jnp.einsum("nd,mdc->mnc", x, w) + b[:, None, :]          # [M, N, C]
    z = jnp.sum(outs * att[None, None, :, 0], axis=-1).T            # [N, M]
    z = z - z.max(axis=1, keepdims=True)
    srt = -jnp.sort(-z, axis=1)
    cs = jnp.cumsum(srt, axis=1) - 1.0
    rho = jnp.arange(1, M + 1, dtype=z.dtype)
    supp = (rho * srt > cs).sum(axis=1)
    tau = jnp.take_along_axis(cs, supp[:, None] - 1, axis=1) / supp[:, None].astype(z.dtype)
    p = jnp.maximum(z - tau, 0.0)                                   # [N, M]
    return jnp.sum(p.T[:, :, None] * outs, axis=0)                  # [N, C]


def _bf16_exact(a):
    # Round test inputs onto the bf16 grid so the numerical check is independent of the
    # MXU's f32-matmul pass-count defaults (kernel vs. XLA reference).
    return a.astype(jnp.bfloat16).astype(jnp.float32)


if __name__ == "__main__":
    # Small shapes consistent with the module: hidden D=32, num_classes C=4, M=3 heads.
    D, C, M = 32, 4, 3
    key = jax.random.PRNGKey(0)
    kx0, kw, kb, ka, kx1 = jax.random.split(key, 5)

    # Deterministic stand-ins for model_list[i].gnn.cls (nn.Linear(D, C)), stored as [M, D, C].
    w = _bf16_exact(jax.random.normal(kw, (M, D, C), dtype=jnp.float32) * (1.0 / jnp.sqrt(D)))
    b = _bf16_exact(jax.random.normal(kb, (M, C), dtype=jnp.float32) * 0.1)
    # att: Parameter([num_classes, 1]) with xavier_normal init (std = sqrt(2/(C+1))).
    att = _bf16_exact(jax.random.normal(ka, (C, 1), dtype=jnp.float32) * jnp.sqrt(2.0 / (C + 1)))

    # --- tiny module-scale smoke test: single block -------------------------------------
    N0 = 16
    x0 = _bf16_exact(jax.random.normal(kx0, (N0, D), dtype=jnp.float32))
    out0 = jax.block_until_ready(mlp_module_forward(x0, w, b, att))
    ref0 = reference_forward(x0, w, b, att)
    assert out0.shape == (N0, C)
    assert jnp.allclose(out0, ref0, atol=5e-2, rtol=0.0), "f32 single-block mismatch"

    # --- ragged batch, 2-step grid (exercises pipelining + partial last tile) -----------
    N1 = 250
    x1 = _bf16_exact(jax.random.normal(kx1, (N1, D), dtype=jnp.float32))
    ref1 = reference_forward(x1, w, b, att)
    out1 = jax.block_until_ready(mlp_module_forward(x1, w, b, att, tile_n=128))
    assert out1.shape == (N1, C)
    assert bool(jnp.all(jnp.isfinite(out1)))
    assert jnp.allclose(out1, ref1, atol=5e-2, rtol=0.0), "f32 ragged-grid mismatch"

    # --- bf16 MXU path (f32 accumulation; sparsemax/logits stay f32) ---------------------
    out2 = jax.block_until_ready(
        mlp_module_forward(x1, w, b, att, tile_n=128, matmul_dtype=jnp.bfloat16))
    assert out2.shape == (N1, C)
    assert bool(jnp.all(jnp.isfinite(out2)))
    assert jnp.allclose(out2, ref1, atol=5e-2, rtol=0.0), "bf16 mismatch"

    print("KERNEL_OK")
</pallas_src>

<mosaic_0001>
module attributes {stable_mosaic.version = 11 : i64} {
  func.func @_mlp_sparsemax_kernel(%arg0: i32, %arg1: memref<16x32xf32, #tpu.memory_space<vmem>>, %arg2: memref<16x32xf32, #tpu.memory_space<vmem>>, %arg3: memref<16x1xf32, #tpu.memory_space<vmem>>, %arg4: memref<4xf32, #tpu.memory_space<smem>>, %arg5: memref<4x16xf32, #tpu.memory_space<vmem>>) attributes {dimension_semantics = [#tpu.dimension_semantics<parallel>], iteration_bounds = array<i64: 1>, scalar_prefetch = 0 : i64, scratch_operands = 0 : i64, tpu.core_type = #tpu.core_type<tc>, window_params = [{transform_indices = @transform_0, window_bounds = array<i64: 16, 32>}, {pipeline_mode = #tpu.pipeline_mode<synchronous>, transform_indices = @transform_1, window_bounds = array<i64: 16, 32>}, {pipeline_mode = #tpu.pipeline_mode<synchronous>, transform_indices = @transform_2, window_bounds = array<i64: 16, 1>}, {transform_indices = @transform_3, window_bounds = array<i64: 4>}, {transform_indices = @transform_4, window_bounds = array<i64: 4, 16>}]} {
    %c0 = arith.constant 0 : index
    %c0_0 = arith.constant 0 : index
    %0 = vector.load %arg2[%c0, %c0_0] : memref<16x32xf32, #tpu.memory_space<vmem>>, vector<16x32xf32>
    %c0_1 = arith.constant 0 : index
    %c0_2 = arith.constant 0 : index
    %1 = vector.load %arg1[%c0_1, %c0_2] : memref<16x32xf32, #tpu.memory_space<vmem>>, vector<16x32xf32>
    %cst = arith.constant dense<0.000000e+00> : vector<16x16xf32>
    %2 = tpu.matmul %0, %1, %cst {dimension_numbers = #tpu.dot_dimension_numbers<[1], [1], [0], [0], [0, 0, 1, 0], [], []>} : vector<16x32xf32>, vector<16x32xf32>, vector<16x16xf32> -> vector<16x16xf32>
    %c0_3 = arith.constant 0 : index
    %c0_4 = arith.constant 0 : index
    %3 = vector.load %arg3[%c0_3, %c0_4] : memref<16x1xf32, #tpu.memory_space<vmem>>, vector<16x1xf32>
    %4 = vector.broadcast %3 : vector<16x1xf32> to vector<16x16xf32>
    %5 = arith.addf %2, %4 : vector<16x16xf32>
    %6 = vector.extract_strided_slice %5 {offsets = [0, 0], sizes = [4, 16], strides = [1, 1]} : vector<16x16xf32> to vector<4x16xf32>
    %7 = vector.extract_strided_slice %6 {offsets = [0, 0], sizes = [1, 16], strides = [1, 1]} : vector<4x16xf32> to vector<1x16xf32>
    %c0_5 = arith.constant 0 : index
    %8 = memref.load %arg4[%c0_5] : memref<4xf32, #tpu.memory_space<smem>>
    %9 = vector.broadcast %8 : f32 to vector<1x16xf32>
    %10 = arith.mulf %7, %9 : vector<1x16xf32>
    %11 = vector.extract_strided_slice %6 {offsets = [1, 0], sizes = [1, 16], strides = [1, 1]} : vector<4x16xf32> to vector<1x16xf32>
    %c1 = arith.constant 1 : index
    %12 = memref.load %arg4[%c1] : memref<4xf32, #tpu.memory_space<smem>>
    %13 = vector.broadcast %12 : f32 to vector<1x16xf32>
    %14 = arith.mulf %11, %13 : vector<1x16xf32>
    %15 = arith.addf %10, %14 : vector<1x16xf32>
    %16 = vector.extract_strided_slice %6 {offsets = [2, 0], sizes = [1, 16], strides = [1, 1]} : vector<4x16xf32> to vector<1x16xf32>
    %c2 = arith.constant 2 : index
    %17 = memref.load %arg4[%c2] : memref<4xf32, #tpu.memory_space<smem>>
    %18 = vector.broadcast %17 : f32 to vector<1x16xf32>
    %19 = arith.mulf %16, %18 : vector<1x16xf32>
    %20 = arith.addf %15, %19 : vector<1x16xf32>
    %21 = vector.extract_strided_slice %6 {offsets = [3, 0], sizes = [1, 16], strides = [1, 1]} : vector<4x16xf32> to vector<1x16xf32>
    %c3 = arith.constant 3 : index
    %22 = memref.load %arg4[%c3] : memref<4xf32, #tpu.memory_space<smem>>
    %23 = vector.broadcast %22 : f32 to vector<1x16xf32>
    %24 = arith.mulf %21, %23 : vector<1x16xf32>
    %25 = arith.addf %20, %24 : vector<1x16xf32>
    %26 = vector.extract_strided_slice %5 {offsets = [4, 0], sizes = [4, 16], strides = [1, 1]} : vector<16x16xf32> to vector<4x16xf32>
    %27 = vector.extract_strided_slice %26 {offsets = [0, 0], sizes = [1, 16], strides = [1, 1]} : vector<4x16xf32> to vector<1x16xf32>
    %c0_6 = arith.constant 0 : index
    %28 = memref.load %arg4[%c0_6] : memref<4xf32, #tpu.memory_space<smem>>
    %29 = vector.broadcast %28 : f32 to vector<1x16xf32>
    %30 = arith.mulf %27, %29 : vector<1x16xf32>
    %31 = vector.extract_strided_slice %26 {offsets = [1, 0], sizes = [1, 16], strides = [1, 1]} : vector<4x16xf32> to vector<1x16xf32>
    %c1_7 = arith.constant 1 : index
    %32 = memref.load %arg4[%c1_7] : memref<4xf32, #tpu.memory_space<smem>>
    %33 = vector.broadcast %32 : f32 to vector<1x16xf32>
    %34 = arith.mulf %31, %33 : vector<1x16xf32>
    %35 = arith.addf %30, %34 : vector<1x16xf32>
    %36 = vector.extract_strided_slice %26 {offsets = [2, 0], sizes = [1, 16], strides = [1, 1]} : vector<4x16xf32> to vector<1x16xf32>
    %c2_8 = arith.constant 2 : index
    %37 = memref.load %arg4[%c2_8] : memref<4xf32, #tpu.memory_space<smem>>
    %38 = vector.broadcast %37 : f32 to vector<1x16xf32>
    %39 = arith.mulf %36, %38 : vector<1x16xf32>
    %40 = arith.addf %35, %39 : vector<1x16xf32>
    %41 = vector.extract_strided_slice %26 {offsets = [3, 0], sizes = [1, 16], strides = [1, 1]} : vector<4x16xf32> to vector<1x16xf32>
    %c3_9 = arith.constant 3 : index
    %42 = memref.load %arg4[%c3_9] : memref<4xf32, #tpu.memory_space<smem>>
    %43 = vector.broadcast %42 : f32 to vector<1x16xf32>
    %44 = arith.mulf %41, %43 : vector<1x16xf32>
    %45 = arith.addf %40, %44 : vector<1x16xf32>
    %46 = vector.extract_strided_slice %5 {offsets = [8, 0], sizes = [4, 16], strides = [1, 1]} : vector<16x16xf32> to vector<4x16xf32>
    %47 = vector.extract_strided_slice %46 {offsets = [0, 0], sizes = [1, 16], strides = [1, 1]} : vector<4x16xf32> to vector<1x16xf32>
    %c0_10 = arith.constant 0 : index
    %48 = memref.load %arg4[%c0_10] : memref<4xf32, #tpu.memory_space<smem>>
    %49 = vector.broadcast %48 : f32 to vector<1x16xf32>
    %50 = arith.mulf %47, %49 : vector<1x16xf32>
    %51 = vector.extract_strided_slice %46 {offsets = [1, 0], sizes = [1, 16], strides = [1, 1]} : vector<4x16xf32> to vector<1x16xf32>
    %c1_11 = arith.constant 1 : index
    %52 = memref.load %arg4[%c1_11] : memref<4xf32, #tpu.memory_space<smem>>
    %53 = vector.broadcast %52 : f32 to vector<1x16xf32>
    %54 = arith.mulf %51, %53 : vector<1x16xf32>
    %55 = arith.addf %50, %54 : vector<1x16xf32>
    %56 = vector.extract_strided_slice %46 {offsets = [2, 0], sizes = [1, 16], strides = [1, 1]} : vector<4x16xf32> to vector<1x16xf32>
    %c2_12 = arith.constant 2 : index
    %57 = memref.load %arg4[%c2_12] : memref<4xf32, #tpu.memory_space<smem>>
    %58 = vector.broadcast %57 : f32 to vector<1x16xf32>
    %59 = arith.mulf %56, %58 : vector<1x16xf32>
    %60 = arith.addf %55, %59 : vector<1x16xf32>
    %61 = vector.extract_strided_slice %46 {offsets = [3, 0], sizes = [1, 16], strides = [1, 1]} : vector<4x16xf32> to vector<1x16xf32>
    %c3_13 = arith.constant 3 : index
    %62 = memref.load %arg4[%c3_13] : memref<4xf32, #tpu.memory_space<smem>>
    %63 = vector.broadcast %62 : f32 to vector<1x16xf32>
    %64 = arith.mulf %61, %63 : vector<1x16xf32>
    %65 = arith.addf %60, %64 : vector<1x16xf32>
    %66 = arith.maximumf %25, %45 : vector<1x16xf32>
    %67 = arith.maximumf %66, %65 : vector<1x16xf32>
    %68 = arith.subf %25, %67 : vector<1x16xf32>
    %69 = arith.subf %45, %67 : vector<1x16xf32>
    %70 = arith.subf %65, %67 : vector<1x16xf32>
    %71 = arith.maximumf %68, %69 : vector<1x16xf32>
    %72 = arith.minimumf %68, %69 : vector<1x16xf32>
    %73 = arith.maximumf %72, %70 : vector<1x16xf32>
    %74 = arith.minimumf %72, %70 : vector<1x16xf32>
    %75 = arith.maximumf %71, %73 : vector<1x16xf32>
    %76 = arith.minimumf %71, %73 : vector<1x16xf32>
    %cst_14 = arith.constant 1.000000e+00 : f32
    %77 = vector.broadcast %cst_14 : f32 to vector<1x16xf32>
    %78 = arith.subf %75, %77 : vector<1x16xf32>
    %79 = arith.addf %75, %76 : vector<1x16xf32>
    %cst_15 = arith.constant 1.000000e+00 : f32
    %80 = vector.broadcast %cst_15 : f32 to vector<1x16xf32>
    %81 = arith.subf %79, %80 : vector<1x16xf32>
    %82 = arith.addf %79, %74 : vector<1x16xf32>
    %cst_16 = arith.constant 1.000000e+00 : f32
    %83 = vector.broadcast %cst_16 : f32 to vector<1x16xf32>
    %84 = arith.subf %82, %83 : vector<1x16xf32>
    %85 = arith.cmpf ogt, %75, %78 : vector<1x16xf32>
    %86 = arith.extui %85 : vector<1x16xi1> to vector<1x16xi32>
    %87 = arith.sitofp %86 : vector<1x16xi32> to vector<1x16xf32>
    %cst_17 = arith.constant 2.000000e+00 : f32
    %88 = vector.broadcast %cst_17 : f32 to vector<1x16xf32>
    %89 = arith.mulf %88, %76 : vector<1x16xf32>
    %90 = arith.cmpf ogt, %89, %81 : vector<1x16xf32>
    %91 = arith.extui %90 : vector<1x16xi1> to vector<1x16xi32>
    %92 = arith.sitofp %91 : vector<1x16xi32> to vector<1x16xf32>
    %93 = arith.addf %87, %92 : vector<1x16xf32>
    %cst_18 = arith.constant 3.000000e+00 : f32
    %94 = vector.broadcast %cst_18 : f32 to vector<1x16xf32>
    %95 = arith.mulf %94, %74 : vector<1x16xf32>
    %96 = arith.cmpf ogt, %95, %84 : vector<1x16xf32>
    %97 = arith.extui %96 : vector<1x16xi1> to vector<1x16xi32>
    %98 = arith.sitofp %97 : vector<1x16xi32> to vector<1x16xf32>
    %99 = arith.addf %93, %98 : vector<1x16xf32>
    %cst_19 = arith.constant 2.000000e+00 : f32
    %100 = vector.broadcast %cst_19 : f32 to vector<1x16xf32>
    %101 = arith.cmpf oeq, %99, %100 : vector<1x16xf32>
    %102 = arith.select %101, %81, %78 : vector<1x16xi1>, vector<1x16xf32>
    %cst_20 = arith.constant 3.000000e+00 : f32
    %103 = vector.broadcast %cst_20 : f32 to vector<1x16xf32>
    %104 = arith.cmpf oeq, %99, %103 : vector<1x16xf32>
    %105 = arith.select %104, %84, %102 : vector<1x16xi1>, vector<1x16xf32>
    %106 = arith.divf %105, %99 : vector<1x16xf32>
    %107 = arith.subf %68, %106 : vector<1x16xf32>
    %cst_21 = arith.constant 0.000000e+00 : f32
    %108 = vector.broadcast %cst_21 : f32 to vector<1x16xf32>
    %109 = arith.maximumf %107, %108 : vector<1x16xf32>
    %110 = vector.broadcast %109 : vector<1x16xf32> to vector<4x16xf32>
    %111 = arith.mulf %110, %6 : vector<4x16xf32>
    %112 = arith.subf %69, %106 : vector<1x16xf32>
    %cst_22 = arith.constant 0.000000e+00 : f32
    %113 = vector.broadcast %cst_22 : f32 to vector<1x16xf32>
    %114 = arith.maximumf %112, %113 : vector<1x16xf32>
    %115 = vector.broadcast %114 : vector<1x16xf32> to vector<4x16xf32>
    %116 = arith.mulf %115, %26 : vector<4x16xf32>
    %117 = arith.addf %111, %116 : vector<4x16xf32>
    %118 = arith.subf %70, %106 : vector<1x16xf32>
    %cst_23 = arith.constant 0.000000e+00 : f32
    %119 = vector.broadcast %cst_23 : f32 to vector<1x16xf32>
    %120 = arith.maximumf %118, %119 : vector<1x16xf32>
    %121 = vector.broadcast %120 : vector<1x16xf32> to vector<4x16xf32>
    %122 = arith.mulf %121, %46 : vector<4x16xf32>
    %123 = arith.addf %117, %122 : vector<4x16xf32>
    %c0_24 = arith.constant 0 : index
    %c0_25 = arith.constant 0 : index
    %124 = vector.load %arg5[%c0_24, %c0_25] : memref<4x16xf32, #tpu.memory_space<vmem>>, vector<4x16xf32>
    tpu.vector_store %arg5[%c0_24, %c0_25], %123 {strides = array<i32>} : memref<4x16xf32, #tpu.memory_space<vmem>>, vector<4x16xf32>,
    return
  }
  func.func @transform_0(%arg0: i32) -> (i32, i32) {
    %c0_i32 = arith.constant 0 : i32
    %c0_i32_0 = arith.constant 0 : i32
    return %arg0, %c0_i32 : i32, i32
  }
  func.func @transform_1(%arg0: i32) -> (i32, i32) {
    %c0_i32 = arith.constant 0 : i32
    %c0_i32_0 = arith.constant 0 : i32
    %c0_i32_1 = arith.constant 0 : i32
    return %c0_i32, %c0_i32_0 : i32, i32
  }
  func.func @transform_2(%arg0: i32) -> (i32, i32) {
    %c0_i32 = arith.constant 0 : i32
    %c0_i32_0 = arith.constant 0 : i32
    %c0_i32_1 = arith.constant 0 : i32
    return %c0_i32, %c0_i32_0 : i32, i32
  }
  func.func @transform_3(%arg0: i32) -> i32 {
    %c0_i32 = arith.constant 0 : i32
    %c0_i32_0 = arith.constant 0 : i32
    return %c0_i32 : i32
  }
  func.func @transform_4(%arg0: i32) -> (i32, i32) {
    %c0_i32 = arith.constant 0 : i32
    %c0_i32_0 = arith.constant 0 : i32
    return %c0_i32, %arg0 : i32, i32
  }
}

</mosaic_0001>

<llo_original>
// kernel: tpu_custom_call.1
$region0: #{tpu_custom_call.1}
  #allocation0 [shape = 'u32[]', space=smem, size = 0x4, offset = 0x4, fixed_abs, tag = 'smem constant byte address 0x4 - core index']
  #allocation1 [shape = 'u32[144,128]{1,0:T(1,128)}', space=vmem, size = 0x12000, scoped, tag = 'internal scratch']
  %s0 = inlined_call_operand.vmem [shape: f32[16,32], index: 0, kind: input, shape index: {}]
  %s1 = inlined_call_operand.hbm [shape: f32[16,32], index: 1, kind: input, shape index: {}]
  %s2 = inlined_call_operand.vmem [shape: f32[16,1], index: 2, kind: input, shape index: {}]
  %s3 = inlined_call_operand.vmem [shape: f32[4], index: 3, kind: input, shape index: {}]
  %s4 = inlined_call_operand.hbm [shape: f32[4,16], index: 4, kind: output, shape index: {}]
  %s5 = sld [smem:[#allocation0]]
  $region34: #{tpu_custom_call.1} parent=0
    _
  %s7 = ssub.s32 1, %s5
  %s8 = scalar_select 0, %s7, %s5
  $region1: #{tpu_custom_call.1} parent=0
    #allocation2 [shape = 'u8[8192]{0}', space=vmem, size = 0x2000, scoped, tag = 'input window, operand 1, single buffered']
    #allocation3 [shape = 's32[1]{0}', space=sflag, size = 0x4, scoped, tag = 'scoped memory for tpu_custom_call.1']
    #allocation4 [shape = 's32[1]{0}', space=sflag, size = 0x4, scoped, tag = 'scoped memory for tpu_custom_call.1']
    #allocation5 [shape = 's32[1]{0}', space=sflag, size = 0x4, scoped, tag = 'scoped memory for tpu_custom_call.1']
    #allocation6 [shape = 'u8[512]{0}', space=smem, size = 0x200, scoped, tag = 'input window, operand 3, single buffered']
    #allocation7 [shape = 'u8[2048]{0}', space=vmem, size = 0x800, scoped, tag = 'output window, operand 0, single buffered']
    %9 = vsyncpa [#allocation3], 0
    %10 = vsyncpa [#allocation5], 0
    %11 = vsyncpa [#allocation4], 0
    // Predicated region
    $region2: #{tpu_custom_call.1} parent=1 // pred_check
      _
    $region3: #{tpu_custom_call.1} parent=1 // pred_check_branch
      %13 = sbr.rel (0) target = $region5
    $region4: #{tpu_custom_call.1} parent=1 // pred_region
      _
    $region5: #{tpu_custom_call.1} parent=1 // pred_fallthru
      _
    // Predicated region
    $region6: #{tpu_custom_call.1} parent=1 // pred_check
      _
    $region7: #{tpu_custom_call.1} parent=1 // pred_check_branch
      %15 = sbr.rel (0) target = $region9
    $region8: #{tpu_custom_call.1} parent=1 // pred_region
      %s17 = ssub.s32 256, 256
      %18 = vsyncadd [#allocation3], %s17
      %s19 = sshll.u32 [#allocation2], 4
      %s20 = int_to_ptr.vmem [resolvable:$true] %s19
      %25 = dma.hbm_to_vmem [thread:$0]  %s1, 256, %s20, [#allocation3], 128, 128, 8
    $region9: #{tpu_custom_call.1} parent=1 // pred_fallthru
      _
    // Predicated region
    $region10: #{tpu_custom_call.1} parent=1 // pred_check
      _
    $region11: #{tpu_custom_call.1} parent=1 // pred_check_branch
      %27 = sbr.rel (0) target = $region13
    $region12: #{tpu_custom_call.1} parent=1 // pred_region
      _
    $region13: #{tpu_custom_call.1} parent=1 // pred_fallthru
      _
    // Predicated region
    $region14: #{tpu_custom_call.1} parent=1 // pred_check
      _
    $region15: #{tpu_custom_call.1} parent=1 // pred_check_branch
      %29 = sbr.rel (0) target = $region17
    $region16: #{tpu_custom_call.1} parent=1 // pred_region
      %s31 = ssub.s32 16, 16
      %32 = vsyncadd [#allocation5], %s31
      %s34 = sshll.u32 %s3, 4
      %s35 = int_to_ptr.vmem [resolvable:$true] %s34
      %37 = dma.vmem_to_smem %s35, 16, [#allocation6], [#allocation5]
    $region17: #{tpu_custom_call.1} parent=1 // pred_fallthru
      _
    // Predicated region
    $region18: #{tpu_custom_call.1} parent=1 // pred_check
      _
    $region19: #{tpu_custom_call.1} parent=1 // pred_check_branch
      %39 = sbr.rel (0) target = $region21
    $region20: #{tpu_custom_call.1} parent=1 // pred_region
      %40 = dma.done [#allocation3], 256
    $region21: #{tpu_custom_call.1} parent=1 // pred_fallthru
      _
    // Predicated region
    $region22: #{tpu_custom_call.1} parent=1 // pred_check
      _
    $region23: #{tpu_custom_call.1} parent=1 // pred_check_branch
      %42 = sbr.rel (0) target = $region25
    $region24: #{tpu_custom_call.1} parent=1 // pred_region
      %43 = dma.done [#allocation5], 16
    $region25: #{tpu_custom_call.1} parent=1 // pred_fallthru
      _
    %44 = sfence
    %v45 = vld [vmem:[#allocation2] sm:$0xff]
    %v46 = vld [vmem:[#allocation2 + $0x8] sm:$0xff]
    %v47 = vld [vmem:[%s0] sm:$0xff]
    %v48 = vld [vmem:[%s0 + $0x8] sm:$0xff]
    %v49 = vld [vmem:[%s2] sm:$0xff]
    %v50 = vld [vmem:[%s2 + $0x8] sm:$0xff]
    %52 = vset.pattern.permute.xlu0 0
    %53 = vperm.xlu0 %52, %v49
    %v54 = vpop.permute.xlu0 %53
    %57 = vset.pattern.permute.xlu0 0
    %58 = vperm.xlu0 %57, %v50
    %v59 = vpop.permute.xlu0 %58
    %vm61 = vcmask 261120
    %v63 = vsel %vm61, %v45, 0
    %v66 = vsel %vm61, %v46, 0
    %v69 = vsel %vm61, %v47, 0
    %v72 = vsel %vm61, %v48, 0
    %74 = vmatprep.subr.mxu0 0.0
    %75 = vmatpush1.xpose.msra.mxu0 %v69
    %76 = vmatprep.subr.mxu0 0.0
    %77 = vmatpush1.xpose.msra.mxu0 %v72
    %78 = vmatprep.subr.mxu0 0.0
    %79 = vmatpush1.xpose.msra.mxu0 0.0
    %80 = vmatprep.subr.mxu0 0.0
    %81 = vmatpush1.xpose.msra.mxu0 0.0
    %82 = vmatprep.subr.mxu0 0.0
    %83 = vmatpush1.xpose.msra.mxu0 0.0
    %84 = vmatprep.subr.mxu0 0.0
    %85 = vmatpush1.xpose.msra.mxu0 0.0
    %86 = vmatprep.subr.mxu0 0.0
    %87 = vmatpush1.xpose.msra.mxu0 0.0
    %88 = vmatprep.subr.mxu0 0.0
    %89 = vmatpush1.xpose.msra.mxu0 0.0
    %90 = vmatprep.subr.mxu0 0.0
    %91 = vmatpush1.xpose.msra.mxu0 0.0
    %92 = vmatprep.subr.mxu0 0.0
    %93 = vmatpush1.xpose.msra.mxu0 0.0
    %94 = vmatprep.subr.mxu0 0.0
    %95 = vmatpush1.xpose.msra.mxu0 0.0
    %96 = vmatprep.subr.mxu0 0.0
    %97 = vmatpush1.xpose.msra.mxu0 0.0
    %98 = vmatprep.subr.mxu0 0.0
    %99 = vmatpush1.xpose.msra.mxu0 0.0
    %100 = vmatprep.subr.mxu0 0.0
    %101 = vmatpush1.xpose.msra.mxu0 0.0
    %102 = vmatprep.subr.mxu0 0.0
    %103 = vmatpush1.xpose.msra.mxu0 0.0
    %104 = vmatprep.subr.mxu0 0.0
    %105 = vmatpush1.xpose.msra.mxu0 0.0
    %106 = vmatprep.subr.mxu0 0.0
    %107 = vmatpush1.xpose.msra.mxu0 0.0
    %108 = vmatprep.subr.mxu0 0.0
    %109 = vmatpush1.xpose.msra.mxu0 0.0
    %110 = vmatprep.subr.mxu0 0.0
    %111 = vmatpush1.xpose.msra.mxu0 0.0
    %112 = vmatprep.subr.mxu0 0.0
    %113 = vmatpush1.xpose.msra.mxu0 0.0
    %114 = vmatprep.subr.mxu0 0.0
    %115 = vmatpush1.xpose.msra.mxu0 0.0
    %116 = vmatprep.subr.mxu0 0.0
    %117 = vmatpush1.xpose.msra.mxu0 0.0
    %118 = vmatprep.subr.mxu0 0.0
    %119 = vmatpush1.xpose.msra.mxu0 0.0
    %120 = vmatprep.subr.mxu0 0.0
    %121 = vmatpush1.xpose.msra.mxu0 0.0
    %122 = vmatprep.subr.mxu0 0.0
    %123 = vmatpush1.xpose.msra.mxu0 0.0
    %124 = vmatprep.subr.mxu0 0.0
    %125 = vmatpush1.xpose.msra.mxu0 0.0
    %126 = vmatprep.subr.mxu0 0.0
    %127 = vmatpush1.xpose.msra.mxu0 0.0
    %128 = vmatprep.subr.mxu0 0.0
    %129 = vmatpush1.xpose.msra.mxu0 0.0
    %130 = vmatprep.subr.mxu0 0.0
    %131 = vmatpush1.xpose.msra.mxu0 0.0
    %132 = vmatprep.subr.mxu0 0.0
    %133 = vmatpush1.xpose.msra.mxu0 0.0
    %134 = vmatprep.subr.mxu0 0.0
    %135 = vmatpush1.xpose.msra.mxu0 0.0
    %136 = vmatprep.subr.mxu0 0.0
    %137 = vmatpush1.xpose.msra.mxu0 0.0
    %138 = vmatprep.mubr.f32.mxu0 0.0
    %139 = vmatmul.mubr.f32.gmra.mrb[0].mxu0 %v63
    %v140 = vpop.f32.mrb[0].mxu0
    %v141 = vadd.f32 %v54, %v140
    %v142 = vpop.f32.mrb[0].mxu0
    %143 = vmatprep.mubr.f32.mxu0 0.0
    %144 = vmatmul.mubr.f32.gmra.mrb[0].mxu0 %v66
    %v145 = vpop.f32.mrb[0].mxu0
    %v146 = vadd.f32 %v59, %v145
    %v147 = vpop.f32.mrb[0].mxu0
    %148 = vdwg.mxu0
    %s149 = sld [smem:[#allocation6]]
    %v150 = vstv %s149
    %v151 = vmul.f32 %v141, %v150
    %s152 = sld [smem:[#allocation6 + $0x1]]
    %v153 = vstv %s152
    %v154 = vmul.f32 %v141, %v153
    %v156 = vrot.slane %v154, 1
    %v158 = vadd.f32 %v151, %v156
    %s159 = sld [smem:[#allocation6 + $0x2]]
    %v160 = vstv %s159
    %v161 = vmul.f32 %v141, %v160
    %v163 = vrot.slane %v161, 2
    %v165 = vadd.f32 %v158, %v163
    %s166 = sld [smem:[#allocation6 + $0x3]]
    %v167 = vstv %s166
    %v168 = vmul.f32 %v141, %v167
    %v170 = vrot.slane %v168, 3
    %v172 = vadd.f32 %v165, %v170
    %v173 = vmul.f32 %v146, %v150
    %v174 = vmul.f32 %v146, %v153
    %v176 = vrot.slane %v174, 1
    %v178 = vadd.f32 %v173, %v176
    %v179 = vmul.f32 %v146, %v160
    %v181 = vrot.slane %v179, 2
    %v183 = vadd.f32 %v178, %v181
    %v184 = vmul.f32 %v146, %v167
    %v186 = vrot.slane %v184, 3
    %v188 = vadd.f32 %v183, %v186
    %v190 = vrot.slane %v172, 4
    %v192 = vmax.f32 %v172, %v190
    %v193 = vmax.f32 %v192, %v188
    %v194 = vsub.f32 %v172, %v193
    %v196 = vrot.slane %v193, 4
    %v198 = vsub.f32 %v172, %v196
    %v199 = vsub.f32 %v188, %v193
    %v201 = vrot.slane %v198, 4
    %v203 = vmax.f32 %v194, %v201
    %v204 = vmin.f32 %v194, %v201
    %v205 = vmax.f32 %v204, %v199
    %v206 = vmin.f32 %v204, %v199
    %v207 = vmax.f32 %v203, %v205
    %v208 = vmin.f32 %v203, %v205
    %v209 = vsub.f32 %v207, 1.0
    %v210 = vadd.f32 %v207, %v208
    %v211 = vsub.f32 %v210, 1.0
    %v212 = vadd.f32 %v210, %v206
    %v213 = vsub.f32 %v212, 1.0
    %vm214 = vcmp.gt.f32.partialorder %v207, %v209
    %v215 = vsel %vm214, 1, 0
    %v216 = vcvt.s32.f32 %v215
    %v217 = vmul.f32 %v208, 2.0
    %vm218 = vcmp.gt.f32.partialorder %v217, %v211
    %v219 = vsel %vm218, 1, 0
    %v220 = vcvt.s32.f32 %v219
    %v221 = vadd.f32 %v216, %v220
    %v222 = vmul.f32 %v206, 3.0
    %vm223 = vcmp.gt.f32.partialorder %v222, %v213
    %v224 = vsel %vm223, 1, 0
    %v225 = vcvt.s32.f32 %v224
    %v226 = vadd.f32 %v221, %v225
    %vm227 = vcmp.eq.f32.partialorder %v226, 2.0
    %v228 = vsel %vm227, %v211, %v209
    %vm229 = vcmp.eq.f32.partialorder %v226, 3.0
    %v230 = vsel %vm229, %v213, %v228
    %v231 = vrcp.pop %v226
    %v232 = vmul.f32 %v230, %v231
    %v233 = vsub.f32 %v194, %v232
    %v234 = vmax.f32 %v233, 0.0
    %v235 = vlaneseq
    %v236 = vshrl.u32 %v235, 7
    %v237 = vsub.s32 0, %v236
    %v238 = vrot.slane %v234, %v237
    %v239 = vmul.f32 %v238, %v141
    %v241 = vrot.slane %v232, 4
    %v243 = vsub.f32 %v198, %v241
    %v244 = vmax.f32 %v243, 0.0
    %v245 = vlaneseq
    %v246 = vshrl.u32 %v245, 7
    %v247 = vsub.s32 4, %v246
    %v248 = vrot.slane %v244, %v247
    %v249 = vmul.f32 %v248, %v141
    %v251 = vrot.slane %v249, 4
    %v253 = vadd.f32 %v239, %v251
    %v254 = vsub.f32 %v199, %v232
    %v255 = vmax.f32 %v254, 0.0
    %v256 = vlaneseq
    %v257 = vshrl.u32 %v256, 7
    %v258 = vsub.s32 0, %v257
    %v259 = vrot.slane %v255, %v258
    %v260 = vmul.f32 %v259, %v146
    %v261 = vadd.f32 %v253, %v260
    %vm262 = vcmask 125952
    %263 = vst.msk [vmem:[#allocation7] sm:$0xf] %vm262, %v261
    // Predicated region
    $region26: #{tpu_custom_call.1} parent=1 // pred_check
      _
    $region27: #{tpu_custom_call.1} parent=1 // pred_check_branch
      %265 = sbr.rel (0) target = $region29
    $region28: #{tpu_custom_call.1} parent=1 // pred_region
      %s267 = ssub.s32 64, 64
      %268 = vsyncadd [#allocation4], %s267
      %s270 = sshll.u32 [#allocation7], 4
      %s271 = int_to_ptr.vmem [resolvable:$true] %s270
      %273 = dma.vmem_to_hbm [thread:$0]  %s271, 64, %s4, [#allocation4]
    $region29: #{tpu_custom_call.1} parent=1 // pred_fallthru
      _
    // Predicated region
    $region30: #{tpu_custom_call.1} parent=1 // pred_check
      _
    $region31: #{tpu_custom_call.1} parent=1 // pred_check_branch
      %275 = sbr.rel (0) target = $region33
    $region32: #{tpu_custom_call.1} parent=1 // pred_region
      %276 = dma.done [#allocation4], 64
    $region33: #{tpu_custom_call.1} parent=1 // pred_fallthru
      _
    %277 = vsyncpa [#allocation3], 1
    %278 = vsyncpa [#allocation4], 1
    %279 = vsyncpa [#allocation5], 1

</llo_original>
